<compile_context>
chip_gen: v7x
topology: tpu7x:2x2x1
jax: 0.10.0
libtpu: 0.0.40
codegen_flags: <defaults>
</compile_context>

<pallas_src>
import functools
import numpy as np
import jax
import jax.numpy as jnp
from jax.experimental import pallas as pl
from jax.experimental.pallas import tpu as pltpu


# --------------------------------------------------------------------------
# Kernel 1: fused pointwise-conv + QKV in-projection
#   x_flat (Rb, C) @ W_fused (C, 4C) + b  ->  yc (Rb, C), qkv (Rb, 3C)
# --------------------------------------------------------------------------
def proj_kernel(x_ref, w_ref, b_ref, yc_ref, qkv_ref):
    c = yc_ref.shape[-1]
    y = jnp.dot(x_ref[...], w_ref[...], preferred_element_type=jnp.float32)
    y = y + b_ref[...]
    yc_ref[...] = y[:, :c].astype(yc_ref.dtype)
    qkv_ref[...] = y[:, c:].astype(qkv_ref.dtype)


# --------------------------------------------------------------------------
# Kernel 2: multi-head self-attention over each length-F sequence
#   qkv (Sb, L, 3C) -> ysa (Sb, L, C)     (out_proj fused in)
# --------------------------------------------------------------------------
def attn_kernel(num_heads, qkv_ref, wo_ref, bo_ref, o_ref):
    sb, seq_len, c3 = qkv_ref.shape
    c = c3 // 3
    d = c // num_heads
    scale = 1.0 / float(np.sqrt(d))

    qkv = qkv_ref[...].astype(jnp.float32)
    q = qkv[:, :, 0:c] * scale
    k = qkv[:, :, c:2 * c]
    v = qkv[:, :, 2 * c:3 * c]

    # per-head channel mask keeps every contraction full C-wide (MXU friendly,
    # no narrow lane slices); heads are few and statically unrolled.
    col = jax.lax.broadcasted_iota(jnp.int32, (1, 1, c), 2)
    ctx = jnp.zeros((sb, seq_len, c), jnp.float32)
    for h in range(num_heads):
        mask = ((col >= h * d) & (col < (h + 1) * d)).astype(jnp.float32)
        qm = q * mask
        s = jnp.einsum('bic,bjc->bij', qm, k, preferred_element_type=jnp.float32)
        s = s - jnp.max(s, axis=-1, keepdims=True)
        e = jnp.exp(s)
        p = e / jnp.sum(e, axis=-1, keepdims=True)
        ctx = ctx + jnp.einsum('bij,bjc->bic', p, v,
                               preferred_element_type=jnp.float32) * mask

    # fused output projection
    y = jnp.dot(ctx.reshape(sb * seq_len, c), wo_ref[...],
                preferred_element_type=jnp.float32) + bo_ref[...]
    o_ref[...] = y.reshape(sb, seq_len, c).astype(o_ref.dtype)


# --------------------------------------------------------------------------
# Kernel 3: folded BatchNorm (scale/shift) on both branches + ReLU + add
# --------------------------------------------------------------------------
def bn_add_kernel(yc_ref, ysa_ref, ac_ref, bc_ref, asa_ref, bsa_ref, o_ref):
    yc = yc_ref[...].astype(jnp.float32)
    ysa = ysa_ref[...].astype(jnp.float32)
    yc_n = yc * ac_ref[...] + bc_ref[...]
    ysa_n = jnp.maximum(ysa * asa_ref[...] + bsa_ref[...], 0.0)
    o_ref[...] = (yc_n + ysa_n).astype(o_ref.dtype)


# --------------------------------------------------------------------------
# wrapper
# --------------------------------------------------------------------------
def _row_tile(n, pref=512):
    if n <= pref:
        return n
    for t in range(pref, 7, -1):
        if n % t == 0 and t % 8 == 0:
            return t
    return n


def _seq_tile(n, pref=8):
    t = min(n, pref)
    while n % t != 0:
        t -= 1
    return t


def fsa3_block(x, params):
    B, C, T, F = x.shape
    num_heads = params["num_heads"]
    R = B * T * F      # rows in channels-last layout
    S = B * T          # attention "batch" (sequences of length F)

    # single NCHW -> NHWC transpose feeding both branches
    x_nhwc = jnp.transpose(x, (0, 2, 3, 1))               # (B, T, F, C)
    x_flat = x_nhwc.reshape(R, C)

    # fuse 1x1-conv weight with the attention in_proj weight -> one matmul
    w_fused = jnp.concatenate([params["w_pc"].T, params["w_in"].T], axis=1)   # (C, 4C)
    b_fused = jnp.concatenate([params["b_pc"], params["b_in"]])[None, :]      # (1, 4C)

    rb = _row_tile(R)
    yc_lin, qkv = pl.pallas_call(
        proj_kernel,
        out_shape=(jax.ShapeDtypeStruct((R, C), jnp.float32),
                   jax.ShapeDtypeStruct((R, 3 * C), jnp.float32)),
        grid_spec=pltpu.PrefetchScalarGridSpec(
            num_scalar_prefetch=0,
            grid=(R // rb,),
            in_specs=[
                pl.BlockSpec((rb, C), lambda i: (i, 0)),
                pl.BlockSpec((C, 4 * C), lambda i: (0, 0)),
                pl.BlockSpec((1, 4 * C), lambda i: (0, 0)),
            ],
            out_specs=[
                pl.BlockSpec((rb, C), lambda i: (i, 0)),
                pl.BlockSpec((rb, 3 * C), lambda i: (i, 0)),
            ],
        ),
        compiler_params=pltpu.CompilerParams(dimension_semantics=("parallel",)),
    )(x_flat, w_fused, b_fused)

    # multi-head self-attention over (S, F, C) sequences
    qkv_seq = qkv.reshape(S, F, 3 * C)
    w_out_t = params["w_out"].T                            # (C, C)
    b_out = params["b_out"][None, :]                       # (1, C)

    sb = _seq_tile(S)
    ysa = pl.pallas_call(
        functools.partial(attn_kernel, num_heads),
        out_shape=jax.ShapeDtypeStruct((S, F, C), jnp.float32),
        grid_spec=pltpu.PrefetchScalarGridSpec(
            num_scalar_prefetch=0,
            grid=(S // sb,),
            in_specs=[
                pl.BlockSpec((sb, F, 3 * C), lambda i: (i, 0, 0)),
                pl.BlockSpec((C, C), lambda i: (0, 0)),
                pl.BlockSpec((1, C), lambda i: (0, 0)),
            ],
            out_specs=pl.BlockSpec((sb, F, C), lambda i: (i, 0, 0)),
        ),
        compiler_params=pltpu.CompilerParams(dimension_semantics=("parallel",)),
    )(qkv_seq, w_out_t, b_out)

    ysa_flat = ysa.reshape(R, C)

    # training-mode BatchNorm statistics: single-pass sum / sum-of-squares,
    # folded into per-channel scale (a) and shift (b)   (tiny XLA glue)
    def _fold(y, gamma, beta):
        s = jnp.sum(y, axis=0)
        ss = jnp.sum(y * y, axis=0)
        mean = s / R
        var = jnp.maximum(ss / R - mean * mean, 0.0)       # biased variance
        a = gamma * jax.lax.rsqrt(var + 1e-5)
        b = beta - mean * a
        return a[None, :].astype(jnp.float32), b[None, :].astype(jnp.float32)

    a_c, b_c = _fold(yc_lin, params["gamma_c"], params["beta_c"])
    a_sa, b_sa = _fold(ysa_flat, params["gamma_sa"], params["beta_sa"])

    # fused BN-apply + ReLU(SA branch) + add
    out_flat = pl.pallas_call(
        bn_add_kernel,
        out_shape=jax.ShapeDtypeStruct((R, C), jnp.float32),
        grid_spec=pltpu.PrefetchScalarGridSpec(
            num_scalar_prefetch=0,
            grid=(R // rb,),
            in_specs=[
                pl.BlockSpec((rb, C), lambda i: (i, 0)),
                pl.BlockSpec((rb, C), lambda i: (i, 0)),
                pl.BlockSpec((1, C), lambda i: (0, 0)),
                pl.BlockSpec((1, C), lambda i: (0, 0)),
                pl.BlockSpec((1, C), lambda i: (0, 0)),
                pl.BlockSpec((1, C), lambda i: (0, 0)),
            ],
            out_specs=pl.BlockSpec((rb, C), lambda i: (i, 0)),
        ),
        compiler_params=pltpu.CompilerParams(dimension_semantics=("parallel",)),
    )(yc_lin, ysa_flat, a_c, b_c, a_sa, b_sa)

    # single output transpose back to NCHW
    return jnp.transpose(out_flat.reshape(B, T, F, C), (0, 3, 1, 2))


# --------------------------------------------------------------------------
# pure-JAX reference (matches PyTorch FSA3Block forward, training-mode BN)
# --------------------------------------------------------------------------
def ref_forward(x, params):
    B, C, T, F = x.shape
    Hn = params["num_heads"]
    d = C // Hn
    hi = jax.lax.Precision.HIGHEST

    x_nhwc = jnp.transpose(x, (0, 2, 3, 1))                # (B, T, F, C)

    def bn(y, gamma, beta):
        mean = y.mean(axis=(0, 1, 2), keepdims=True)
        var = ((y - mean) ** 2).mean(axis=(0, 1, 2), keepdims=True)
        return (y - mean) * jax.lax.rsqrt(var + 1e-5) * gamma + beta

    # pointwise-conv branch
    yc = jnp.einsum('btfc,oc->btfo', x_nhwc, params["w_pc"], precision=hi) + params["b_pc"]
    yc = bn(yc, params["gamma_c"], params["beta_c"])

    # self-attention branch
    xs = x_nhwc.reshape(B * T, F, C)
    qkv = jnp.einsum('sfc,oc->sfo', xs, params["w_in"], precision=hi) + params["b_in"]
    q, k, v = qkv[..., :C], qkv[..., C:2 * C], qkv[..., 2 * C:]
    q = q * (d ** -0.5)
    qh = q.reshape(B * T, F, Hn, d).transpose(0, 2, 1, 3)
    kh = k.reshape(B * T, F, Hn, d).transpose(0, 2, 1, 3)
    vh = v.reshape(B * T, F, Hn, d).transpose(0, 2, 1, 3)
    s = jnp.einsum('shid,shjd->shij', qh, kh, precision=hi)
    p = jax.nn.softmax(s, axis=-1)
    ctx = jnp.einsum('shij,shjd->shid', p, vh, precision=hi)
    ctx = ctx.transpose(0, 2, 1, 3).reshape(B * T, F, C)
    ysa = jnp.einsum('sfc,oc->sfo', ctx, params["w_out"], precision=hi) + params["b_out"]
    ysa = ysa.reshape(B, T, F, C)
    ysa = jnp.maximum(bn(ysa, params["gamma_sa"], params["beta_sa"]), 0.0)

    out = yc + ysa                                         # (B, T, F, C)
    return jnp.transpose(out, (0, 3, 1, 2))                # (B, C, T, F)


# --------------------------------------------------------------------------
# main
# --------------------------------------------------------------------------
if __name__ == "__main__":
    # x: (B, C, T, F); in_channels = C (attention embed dim),
    # hidden_size == nn.MultiheadAttention num_heads (must divide C).
    B, C, T, F = 2, 16, 8, 16
    num_heads = 4

    key = jax.random.PRNGKey(0)
    ks = jax.random.split(key, 11)
    scale = 1.0 / np.sqrt(C)

    params = {
        "num_heads": num_heads,
        # 1x1 conv: weight (C_out, C_in), bias (C_out,)
        "w_pc": jax.random.uniform(ks[0], (C, C), jnp.float32, -scale, scale),
        "b_pc": jax.random.uniform(ks[1], (C,), jnp.float32, -scale, scale),
        # MultiheadAttention: in_proj (3C, C)+(3C,), out_proj (C, C)+(C,)
        "w_in": jax.random.uniform(ks[2], (3 * C, C), jnp.float32, -scale, scale),
        "b_in": jax.random.uniform(ks[3], (3 * C,), jnp.float32, -scale, scale),
        "w_out": jax.random.uniform(ks[4], (C, C), jnp.float32, -scale, scale),
        "b_out": jax.random.uniform(ks[5], (C,), jnp.float32, -scale, scale),
        # BatchNorm2d affine params
        "gamma_c": jax.random.uniform(ks[6], (C,), jnp.float32, 0.5, 1.5),
        "beta_c": jax.random.uniform(ks[7], (C,), jnp.float32, -0.5, 0.5),
        "gamma_sa": jax.random.uniform(ks[8], (C,), jnp.float32, 0.5, 1.5),
        "beta_sa": jax.random.uniform(ks[9], (C,), jnp.float32, -0.5, 0.5),
    }

    x = jax.random.normal(ks[10], (B, C, T, F), jnp.float32)

    out = jax.block_until_ready(fsa3_block(x, params))
    ref = jax.block_until_ready(ref_forward(x, params))

    assert out.shape == (B, C, T, F)
    np.testing.assert_allclose(np.asarray(out), np.asarray(ref), rtol=2e-3, atol=2e-3)

    print("KERNEL_OK")
</pallas_src>

<mosaic_0001>
module attributes {stable_mosaic.version = 11 : i64} {
  func.func @proj_kernel(%arg0: i32, %arg1: memref<256x16xf32, #tpu.memory_space<vmem>>, %arg2: memref<16x64xf32, #tpu.memory_space<vmem>>, %arg3: memref<1x64xf32, #tpu.memory_space<vmem>>, %arg4: memref<256x16xf32, #tpu.memory_space<vmem>>, %arg5: memref<256x48xf32, #tpu.memory_space<vmem>>) attributes {dimension_semantics = [#tpu.dimension_semantics<parallel>], iteration_bounds = array<i64: 1>, scalar_prefetch = 0 : i64, scratch_operands = 0 : i64, tpu.core_type = #tpu.core_type<tc>, window_params = [{transform_indices = @transform_0, window_bounds = array<i64: 256, 16>}, {pipeline_mode = #tpu.pipeline_mode<synchronous>, transform_indices = @transform_1, window_bounds = array<i64: 16, 64>}, {pipeline_mode = #tpu.pipeline_mode<synchronous>, transform_indices = @transform_2, window_bounds = array<i64: 1, 64>}, {transform_indices = @transform_3, window_bounds = array<i64: 256, 16>}, {transform_indices = @transform_4, window_bounds = array<i64: 256, 48>}]} {
    %c0 = arith.constant 0 : index
    %c0_0 = arith.constant 0 : index
    %0 = vector.load %arg1[%c0, %c0_0] : memref<256x16xf32, #tpu.memory_space<vmem>>, vector<256x16xf32>
    %c0_1 = arith.constant 0 : index
    %c0_2 = arith.constant 0 : index
    %1 = vector.load %arg2[%c0_1, %c0_2] : memref<16x64xf32, #tpu.memory_space<vmem>>, vector<16x64xf32>
    %cst = arith.constant dense<0.000000e+00> : vector<256x64xf32>
    %2 = tpu.matmul %0, %1, %cst {dimension_numbers = #tpu.dot_dimension_numbers<[1], [0], [0], [1], [0, 0, 1, 1], [], []>} : vector<256x16xf32>, vector<16x64xf32>, vector<256x64xf32> -> vector<256x64xf32>
    %c0_3 = arith.constant 0 : index
    %c0_4 = arith.constant 0 : index
    %3 = vector.load %arg3[%c0_3, %c0_4] : memref<1x64xf32, #tpu.memory_space<vmem>>, vector<1x64xf32>
    %4 = vector.broadcast %3 : vector<1x64xf32> to vector<256x64xf32>
    %5 = arith.addf %2, %4 : vector<256x64xf32>
    %6 = vector.extract_strided_slice %5 {offsets = [0, 0], sizes = [256, 16], strides = [1, 1]} : vector<256x64xf32> to vector<256x16xf32>
    %c0_5 = arith.constant 0 : index
    %c0_6 = arith.constant 0 : index
    %7 = vector.load %arg4[%c0_5, %c0_6] : memref<256x16xf32, #tpu.memory_space<vmem>>, vector<256x16xf32>
    tpu.vector_store %arg4[%c0_5, %c0_6], %6 {strides = array<i32>} : memref<256x16xf32, #tpu.memory_space<vmem>>, vector<256x16xf32>,
    %8 = vector.extract_strided_slice %5 {offsets = [0, 16], sizes = [256, 48], strides = [1, 1]} : vector<256x64xf32> to vector<256x48xf32>
    %c0_7 = arith.constant 0 : index
    %c0_8 = arith.constant 0 : index
    %9 = vector.load %arg5[%c0_7, %c0_8] : memref<256x48xf32, #tpu.memory_space<vmem>>, vector<256x48xf32>
    tpu.vector_store %arg5[%c0_7, %c0_8], %8 {strides = array<i32>} : memref<256x48xf32, #tpu.memory_space<vmem>>, vector<256x48xf32>,
    return
  }
  func.func @transform_0(%arg0: i32) -> (i32, i32) {
    %c0_i32 = arith.constant 0 : i32
    %c0_i32_0 = arith.constant 0 : i32
    return %arg0, %c0_i32 : i32, i32
  }
  func.func @transform_1(%arg0: i32) -> (i32, i32) {
    %c0_i32 = arith.constant 0 : i32
    %c0_i32_0 = arith.constant 0 : i32
    %c0_i32_1 = arith.constant 0 : i32
    return %c0_i32, %c0_i32_0 : i32, i32
  }
  func.func @transform_2(%arg0: i32) -> (i32, i32) {
    %c0_i32 = arith.constant 0 : i32
    %c0_i32_0 = arith.constant 0 : i32
    %c0_i32_1 = arith.constant 0 : i32
    return %c0_i32, %c0_i32_0 : i32, i32
  }
  func.func @transform_3(%arg0: i32) -> (i32, i32) {
    %c0_i32 = arith.constant 0 : i32
    %c0_i32_0 = arith.constant 0 : i32
    return %arg0, %c0_i32 : i32, i32
  }
  func.func @transform_4(%arg0: i32) -> (i32, i32) {
    %c0_i32 = arith.constant 0 : i32
    %c0_i32_0 = arith.constant 0 : i32
    return %arg0, %c0_i32 : i32, i32
  }
}

</mosaic_0001>

<llo_original>
// kernel: tpu_custom_call.1
$region0: #{tpu_custom_call.1}
  #allocation0 [shape = 'u32[]', space=smem, size = 0x4, offset = 0x4, fixed_abs, tag = 'smem constant byte address 0x4 - core index']
  #allocation1 [shape = 'u32[144,128]{1,0:T(1,128)}', space=vmem, size = 0x12000, scoped, tag = 'internal scratch']
  %s0 = inlined_call_operand.vmem [shape: f32[256,16], index: 0, kind: input, shape index: {}]
  %s1 = inlined_call_operand.vmem [shape: f32[16,64], index: 1, kind: input, shape index: {}]
  %s2 = inlined_call_operand.vmem [shape: f32[1,64], index: 2, kind: input, shape index: {}]
  %s3 = inlined_call_operand.vmem [shape: f32[256,16], index: 3, kind: output, shape index: {0}]
  %s4 = inlined_call_operand.vmem [shape: f32[256,48], index: 4, kind: output, shape index: {1}]
  %5 = xla_tuple %s3, %s4
  %s6 = sld [smem:[#allocation0]]
  $region30: #{tpu_custom_call.1} parent=0
    _
  %s8 = ssub.s32 1, %s6
  %s9 = scalar_select 0, %s8, %s6
  // Predicated region
  $region2: #{tpu_custom_call.1} parent=0 // pred_check
    _
  $region3: #{tpu_custom_call.1} parent=0 // pred_check_branch
    %11 = sbr.rel (0) target = $region5
  $region4: #{tpu_custom_call.1} parent=0 // pred_region
    _
  $region5: #{tpu_custom_call.1} parent=0 // pred_fallthru
    _
  // Predicated region
  $region6: #{tpu_custom_call.1} parent=0 // pred_check
    _
  $region7: #{tpu_custom_call.1} parent=0 // pred_check_branch
    %13 = sbr.rel (0) target = $region9
  $region8: #{tpu_custom_call.1} parent=0 // pred_region
    _
  $region9: #{tpu_custom_call.1} parent=0 // pred_fallthru
    _
  // Predicated region
  $region10: #{tpu_custom_call.1} parent=0 // pred_check
    _
  $region11: #{tpu_custom_call.1} parent=0 // pred_check_branch
    %15 = sbr.rel (0) target = $region13
  $region12: #{tpu_custom_call.1} parent=0 // pred_region
    _
  $region13: #{tpu_custom_call.1} parent=0 // pred_fallthru
    _
  %v16 = vld [vmem:[%s0] sm:$0xff]
  %v17 = vld [vmem:[%s0 + $0x8] sm:$0xff]
  %v18 = vld [vmem:[%s0 + $0x10] sm:$0xff]
  %v19 = vld [vmem:[%s0 + $0x18] sm:$0xff]
  %v20 = vld [vmem:[%s0 + $0x20] sm:$0xff]
  %v21 = vld [vmem:[%s0 + $0x28] sm:$0xff]
  %v22 = vld [vmem:[%s0 + $0x30] sm:$0xff]
  %v23 = vld [vmem:[%s0 + $0x38] sm:$0xff]
  %v24 = vld [vmem:[%s0 + $0x40] sm:$0xff]
  %v25 = vld [vmem:[%s0 + $0x48] sm:$0xff]
  %v26 = vld [vmem:[%s0 + $0x50] sm:$0xff]
  %v27 = vld [vmem:[%s0 + $0x58] sm:$0xff]
  %v28 = vld [vmem:[%s0 + $0x60] sm:$0xff]
  %v29 = vld [vmem:[%s0 + $0x68] sm:$0xff]
  %v30 = vld [vmem:[%s0 + $0x70] sm:$0xff]
  %v31 = vld [vmem:[%s0 + $0x78] sm:$0xff]
  %v32 = vld [vmem:[%s0 + $0x80] sm:$0xff]
  %v33 = vld [vmem:[%s0 + $0x88] sm:$0xff]
  %v34 = vld [vmem:[%s0 + $0x90] sm:$0xff]
  %v35 = vld [vmem:[%s0 + $0x98] sm:$0xff]
  %v36 = vld [vmem:[%s0 + $0xa0] sm:$0xff]
  %v37 = vld [vmem:[%s0 + $0xa8] sm:$0xff]
  %v38 = vld [vmem:[%s0 + $0xb0] sm:$0xff]
  %v39 = vld [vmem:[%s0 + $0xb8] sm:$0xff]
  %v40 = vld [vmem:[%s0 + $0xc0] sm:$0xff]
  %v41 = vld [vmem:[%s0 + $0xc8] sm:$0xff]
  %v42 = vld [vmem:[%s0 + $0xd0] sm:$0xff]
  %v43 = vld [vmem:[%s0 + $0xd8] sm:$0xff]
  %v44 = vld [vmem:[%s0 + $0xe0] sm:$0xff]
  %v45 = vld [vmem:[%s0 + $0xe8] sm:$0xff]
  %v46 = vld [vmem:[%s0 + $0xf0] sm:$0xff]
  %v47 = vld [vmem:[%s0 + $0xf8] sm:$0xff]
  %v48 = vld [vmem:[%s1] sm:$0xff]
  %v49 = vld [vmem:[%s1 + $0x8] sm:$0xff]
  %v50 = vld [vmem:[%s2] sm:$0x1]
  %v52 = vlaneseq
  %v53 = vshrl.u32 %v52, 7
  %v54 = vsub.s32 0, %v53
  %v55 = vrot.slane %v50, %v54
  %vm57 = vcmask 130048
  %v59 = vsel %vm57, %v16, 0
  %v62 = vsel %vm57, %v17, 0
  %v65 = vsel %vm57, %v18, 0
  %v68 = vsel %vm57, %v19, 0
  %v71 = vsel %vm57, %v20, 0
  %v74 = vsel %vm57, %v21, 0
  %v77 = vsel %vm57, %v22, 0
  %v80 = vsel %vm57, %v23, 0
  %v83 = vsel %vm57, %v24, 0
  %v86 = vsel %vm57, %v25, 0
  %v89 = vsel %vm57, %v26, 0
  %v92 = vsel %vm57, %v27, 0
  %v95 = vsel %vm57, %v28, 0
  %v98 = vsel %vm57, %v29, 0
  %v101 = vsel %vm57, %v30, 0
  %v104 = vsel %vm57, %v31, 0
  %v107 = vsel %vm57, %v32, 0
  %v110 = vsel %vm57, %v33, 0
  %v113 = vsel %vm57, %v34, 0
  %v116 = vsel %vm57, %v35, 0
  %v119 = vsel %vm57, %v36, 0
  %v122 = vsel %vm57, %v37, 0
  %v125 = vsel %vm57, %v38, 0
  %v128 = vsel %vm57, %v39, 0
  %v131 = vsel %vm57, %v40, 0
  %v134 = vsel %vm57, %v41, 0
  %v137 = vsel %vm57, %v42, 0
  %v140 = vsel %vm57, %v43, 0
  %v143 = vsel %vm57, %v44, 0
  %v146 = vsel %vm57, %v45, 0
  %v149 = vsel %vm57, %v46, 0
  %v152 = vsel %vm57, %v47, 0
  %154 = vmatprep.subr.mxu0 0.0
  %155 = vmatpush1.msra.mxu0 %v48
  %156 = vmatprep.subr.mxu0 0.0
  %157 = vmatpush1.msra.mxu0 %v49
  %158 = vmatprep.subr.mxu0 0.0
  %159 = vmatpush1.msra.mxu0 0.0
  %160 = vmatprep.subr.mxu0 0.0
  %161 = vmatpush1.msra.mxu0 0.0
  %162 = vmatprep.subr.mxu0 0.0
  %163 = vmatpush1.msra.mxu0 0.0
  %164 = vmatprep.subr.mxu0 0.0
  %165 = vmatpush1.msra.mxu0 0.0
  %166 = vmatprep.subr.mxu0 0.0
  %167 = vmatpush1.msra.mxu0 0.0
  %168 = vmatprep.subr.mxu0 0.0
  %169 = vmatpush1.msra.mxu0 0.0
  %170 = vmatprep.subr.mxu0 0.0
  %171 = vmatpush1.msra.mxu0 0.0
  %172 = vmatprep.subr.mxu0 0.0
  %173 = vmatpush1.msra.mxu0 0.0
  %174 = vmatprep.subr.mxu0 0.0
  %175 = vmatpush1.msra.mxu0 0.0
  %176 = vmatprep.subr.mxu0 0.0
  %177 = vmatpush1.msra.mxu0 0.0
  %178 = vmatprep.subr.mxu0 0.0
  %179 = vmatpush1.msra.mxu0 0.0
  %180 = vmatprep.subr.mxu0 0.0
  %181 = vmatpush1.msra.mxu0 0.0
  %182 = vmatprep.subr.mxu0 0.0
  %183 = vmatpush1.msra.mxu0 0.0
  %184 = vmatprep.subr.mxu0 0.0
  %185 = vmatpush1.msra.mxu0 0.0
  %186 = vmatprep.subr.mxu0 0.0
  %187 = vmatpush1.msra.mxu0 0.0
  %188 = vmatprep.subr.mxu0 0.0
  %189 = vmatpush1.msra.mxu0 0.0
  %190 = vmatprep.subr.mxu0 0.0
  %191 = vmatpush1.msra.mxu0 0.0
  %192 = vmatprep.subr.mxu0 0.0
  %193 = vmatpush1.msra.mxu0 0.0
  %194 = vmatprep.subr.mxu0 0.0
  %195 = vmatpush1.msra.mxu0 0.0
  %196 = vmatprep.subr.mxu0 0.0
  %197 = vmatpush1.msra.mxu0 0.0
  %198 = vmatprep.subr.mxu0 0.0
  %199 = vmatpush1.msra.mxu0 0.0
  %200 = vmatprep.subr.mxu0 0.0
  %201 = vmatpush1.msra.mxu0 0.0
  %202 = vmatprep.subr.mxu0 0.0
  %203 = vmatpush1.msra.mxu0 0.0
  %204 = vmatprep.subr.mxu0 0.0
  %205 = vmatpush1.msra.mxu0 0.0
  %206 = vmatprep.subr.mxu0 0.0
  %207 = vmatpush1.msra.mxu0 0.0
  %208 = vmatprep.subr.mxu0 0.0
  %209 = vmatpush1.msra.mxu0 0.0
  %210 = vmatprep.subr.mxu0 0.0
  %211 = vmatpush1.msra.mxu0 0.0
  %212 = vmatprep.subr.mxu0 0.0
  %213 = vmatpush1.msra.mxu0 0.0
  %214 = vmatprep.subr.mxu0 0.0
  %215 = vmatpush1.msra.mxu0 0.0
  %216 = vmatprep.subr.mxu0 0.0
  %217 = vmatpush1.msra.mxu0 0.0
  %218 = vmatprep.mubr.f32.mxu0 0.0
  %219 = vmatmul.mubr.f32.gmra.mrb[0].mxu0 %v59
  %v220 = vpop.f32.mrb[0].mxu0
  %v221 = vadd.f32 %v55, %v220
  %v222 = vpop.f32.mrb[0].mxu0
  %223 = vmatprep.mubr.f32.mxu0 0.0
  %224 = vmatmul.mubr.f32.gmra.mrb[0].mxu0 %v62
  %v225 = vpop.f32.mrb[0].mxu0
  %v226 = vadd.f32 %v55, %v225
  %v227 = vpop.f32.mrb[0].mxu0
  %228 = vmatprep.mubr.f32.mxu0 0.0
  %229 = vmatmul.mubr.f32.gmra.mrb[0].mxu0 %v65
  %v230 = vpop.f32.mrb[0].mxu0
  %v231 = vadd.f32 %v55, %v230
  %v232 = vpop.f32.mrb[0].mxu0
  %233 = vmatprep.mubr.f32.mxu0 0.0
  %234 = vmatmul.mubr.f32.gmra.mrb[0].mxu0 %v68
  %v235 = vpop.f32.mrb[0].mxu0
  %v236 = vadd.f32 %v55, %v235
  %v237 = vpop.f32.mrb[0].mxu0
  %238 = vmatprep.mubr.f32.mxu0 0.0
  %239 = vmatmul.mubr.f32.gmra.mrb[0].mxu0 %v71
  %v240 = vpop.f32.mrb[0].mxu0
  %v241 = vadd.f32 %v55, %v240
  %v242 = vpop.f32.mrb[0].mxu0
  %243 = vmatprep.mubr.f32.mxu0 0.0
  %244 = vmatmul.mubr.f32.gmra.mrb[0].mxu0 %v74
  %v245 = vpop.f32.mrb[0].mxu0
  %v246 = vadd.f32 %v55, %v245
  %v247 = vpop.f32.mrb[0].mxu0
  %248 = vmatprep.mubr.f32.mxu0 0.0
  %249 = vmatmul.mubr.f32.gmra.mrb[0].mxu0 %v77
  %v250 = vpop.f32.mrb[0].mxu0
  %v251 = vadd.f32 %v55, %v250
  %v252 = vpop.f32.mrb[0].mxu0
  %253 = vmatprep.mubr.f32.mxu0 0.0
  %254 = vmatmul.mubr.f32.gmra.mrb[0].mxu0 %v80
  %v255 = vpop.f32.mrb[0].mxu0
  %v256 = vadd.f32 %v55, %v255
  %v257 = vpop.f32.mrb[0].mxu0
  %258 = vmatprep.mubr.f32.mxu0 0.0
  %259 = vmatmul.mubr.f32.gmra.mrb[0].mxu0 %v83
  %v260 = vpop.f32.mrb[0].mxu0
  %v261 = vadd.f32 %v55, %v260
  %v262 = vpop.f32.mrb[0].mxu0
  %263 = vmatprep.mubr.f32.mxu0 0.0
  %264 = vmatmul.mubr.f32.gmra.mrb[0].mxu0 %v86
  %v265 = vpop.f32.mrb[0].mxu0
  %v266 = vadd.f32 %v55, %v265
  %v267 = vpop.f32.mrb[0].mxu0
  %268 = vmatprep.mubr.f32.mxu0 0.0
  %269 = vmatmul.mubr.f32.gmra.mrb[0].mxu0 %v89
  %v270 = vpop.f32.mrb[0].mxu0
  %v271 = vadd.f32 %v55, %v270
  %v272 = vpop.f32.mrb[0].mxu0
  %273 = vmatprep.mubr.f32.mxu0 0.0
  %274 = vmatmul.mubr.f32.gmra.mrb[0].mxu0 %v92
  %v275 = vpop.f32.mrb[0].mxu0
  %v276 = vadd.f32 %v55, %v275
  %v277 = vpop.f32.mrb[0].mxu0
  %278 = vmatprep.mubr.f32.mxu0 0.0
  %279 = vmatmul.mubr.f32.gmra.mrb[0].mxu0 %v95
  %v280 = vpop.f32.mrb[0].mxu0
  %v281 = vadd.f32 %v55, %v280
  %v282 = vpop.f32.mrb[0].mxu0
  %283 = vmatprep.mubr.f32.mxu0 0.0
  %284 = vmatmul.mubr.f32.gmra.mrb[0].mxu0 %v98
  %v285 = vpop.f32.mrb[0].mxu0
  %v286 = vadd.f32 %v55, %v285
  %v287 = vpop.f32.mrb[0].mxu0
  %288 = vmatprep.mubr.f32.mxu0 0.0
  %289 = vmatmul.mubr.f32.gmra.mrb[0].mxu0 %v101
  %v290 = vpop.f32.mrb[0].mxu0
  %v291 = vadd.f32 %v55, %v290
  %v292 = vpop.f32.mrb[0].mxu0
  %293 = vmatprep.mubr.f32.mxu0 0.0
  %294 = vmatmul.mubr.f32.gmra.mrb[0].mxu0 %v104
  %v295 = vpop.f32.mrb[0].mxu0
  %v296 = vadd.f32 %v55, %v295
  %v297 = vpop.f32.mrb[0].mxu0
  %298 = vmatprep.mubr.f32.mxu0 0.0
  %299 = vmatmul.mubr.f32.gmra.mrb[0].mxu0 %v107
  %v300 = vpop.f32.mrb[0].mxu0
  %v301 = vadd.f32 %v55, %v300
  %v302 = vpop.f32.mrb[0].mxu0
  %303 = vmatprep.mubr.f32.mxu0 0.0
  %304 = vmatmul.mubr.f32.gmra.mrb[0].mxu0 %v110
  %v305 = vpop.f32.mrb[0].mxu0
  %v306 = vadd.f32 %v55, %v305
  %v307 = vpop.f32.mrb[0].mxu0
  %308 = vmatprep.mubr.f32.mxu0 0.0
  %309 = vmatmul.mubr.f32.gmra.mrb[0].mxu0 %v113
  %v310 = vpop.f32.mrb[0].mxu0
  %v311 = vadd.f32 %v55, %v310
  %v312 = vpop.f32.mrb[0].mxu0
  %313 = vmatprep.mubr.f32.mxu0 0.0
  %314 = vmatmul.mubr.f32.gmra.mrb[0].mxu0 %v116
  %v315 = vpop.f32.mrb[0].mxu0
  %v316 = vadd.f32 %v55, %v315
  %v317 = vpop.f32.mrb[0].mxu0
  %318 = vmatprep.mubr.f32.mxu0 0.0
  %319 = vmatmul.mubr.f32.gmra.mrb[0].mxu0 %v119
  %v320 = vpop.f32.mrb[0].mxu0
  %v321 = vadd.f32 %v55, %v320
  %v322 = vpop.f32.mrb[0].mxu0
  %323 = vmatprep.mubr.f32.mxu0 0.0
  %324 = vmatmul.mubr.f32.gmra.mrb[0].mxu0 %v122
  %v325 = vpop.f32.mrb[0].mxu0
  %v326 = vadd.f32 %v55, %v325
  %v327 = vpop.f32.mrb[0].mxu0
  %328 = vmatprep.mubr.f32.mxu0 0.0
  %329 = vmatmul.mubr.f32.gmra.mrb[0].mxu0 %v125
  %v330 = vpop.f32.mrb[0].mxu0
  %v331 = vadd.f32 %v55, %v330
  %v332 = vpop.f32.mrb[0].mxu0
  %333 = vmatprep.mubr.f32.mxu0 0.0
  %334 = vmatmul.mubr.f32.gmra.mrb[0].mxu0 %v128
  %v335 = vpop.f32.mrb[0].mxu0
  %v336 = vadd.f32 %v55, %v335
  %v337 = vpop.f32.mrb[0].mxu0
  %338 = vmatprep.mubr.f32.mxu0 0.0
  %339 = vmatmul.mubr.f32.gmra.mrb[0].mxu0 %v131
  %v340 = vpop.f32.mrb[0].mxu0
  %v341 = vadd.f32 %v55, %v340
  %v342 = vpop.f32.mrb[0].mxu0
  %343 = vmatprep.mubr.f32.mxu0 0.0
  %344 = vmatmul.mubr.f32.gmra.mrb[0].mxu0 %v134
  %v345 = vpop.f32.mrb[0].mxu0
  %v346 = vadd.f32 %v55, %v345
  %v347 = vpop.f32.mrb[0].mxu0
  %348 = vmatprep.mubr.f32.mxu0 0.0
  %349 = vmatmul.mubr.f32.gmra.mrb[0].mxu0 %v137
  %v350 = vpop.f32.mrb[0].mxu0
  %v351 = vadd.f32 %v55, %v350
  %v352 = vpop.f32.mrb[0].mxu0
  %353 = vmatprep.mubr.f32.mxu0 0.0
  %354 = vmatmul.mubr.f32.gmra.mrb[0].mxu0 %v140
  %v355 = vpop.f32.mrb[0].mxu0
  %v356 = vadd.f32 %v55, %v355
  %v357 = vpop.f32.mrb[0].mxu0
  %358 = vmatprep.mubr.f32.mxu0 0.0
  %359 = vmatmul.mubr.f32.gmra.mrb[0].mxu0 %v143
  %v360 = vpop.f32.mrb[0].mxu0
  %v361 = vadd.f32 %v55, %v360
  %v362 = vpop.f32.mrb[0].mxu0
  %363 = vmatprep.mubr.f32.mxu0 0.0
  %364 = vmatmul.mubr.f32.gmra.mrb[0].mxu0 %v146
  %v365 = vpop.f32.mrb[0].mxu0
  %v366 = vadd.f32 %v55, %v365
  %v367 = vpop.f32.mrb[0].mxu0
  %368 = vmatprep.mubr.f32.mxu0 0.0
  %369 = vmatmul.mubr.f32.gmra.mrb[0].mxu0 %v149
  %v370 = vpop.f32.mrb[0].mxu0
  %v371 = vadd.f32 %v55, %v370
  %v372 = vpop.f32.mrb[0].mxu0
  %373 = vmatprep.mubr.f32.mxu0 0.0
  %374 = vmatmul.mubr.f32.gmra.mrb[0].mxu0 %v152
  %v375 = vpop.f32.mrb[0].mxu0
  %v376 = vadd.f32 %v55, %v375
  %v377 = vpop.f32.mrb[0].mxu0
  %378 = vdwg.mxu0
  %379 = vst.msk [vmem:[%s3] sm:$0xff] %vm57, %v221
  %380 = vst.msk [vmem:[%s3 + $0x8] sm:$0xff] %vm57, %v226
  %381 = vst.msk [vmem:[%s3 + $0x10] sm:$0xff] %vm57, %v231
  %382 = vst.msk [vmem:[%s3 + $0x18] sm:$0xff] %vm57, %v236
  %383 = vst.msk [vmem:[%s3 + $0x20] sm:$0xff] %vm57, %v241
  %384 = vst.msk [vmem:[%s3 + $0x28] sm:$0xff] %vm57, %v246
  %385 = vst.msk [vmem:[%s3 + $0x30] sm:$0xff] %vm57, %v251
  %386 = vst.msk [vmem:[%s3 + $0x38] sm:$0xff] %vm57, %v256
  %387 = vst.msk [vmem:[%s3 + $0x40] sm:$0xff] %vm57, %v261
  %388 = vst.msk [vmem:[%s3 + $0x48] sm:$0xff] %vm57, %v266
  %389 = vst.msk [vmem:[%s3 + $0x50] sm:$0xff] %vm57, %v271
  %390 = vst.msk [vmem:[%s3 + $0x58] sm:$0xff] %vm57, %v276
  %391 = vst.msk [vmem:[%s3 + $0x60] sm:$0xff] %vm57, %v281
  %392 = vst.msk [vmem:[%s3 + $0x68] sm:$0xff] %vm57, %v286
  %393 = vst.msk [vmem:[%s3 + $0x70] sm:$0xff] %vm57, %v291
  %394 = vst.msk [vmem:[%s3 + $0x78] sm:$0xff] %vm57, %v296
  %395 = vst.msk [vmem:[%s3 + $0x80] sm:$0xff] %vm57, %v301
  %396 = vst.msk [vmem:[%s3 + $0x88] sm:$0xff] %vm57, %v306
  %397 = vst.msk [vmem:[%s3 + $0x90] sm:$0xff] %vm57, %v311
  %398 = vst.msk [vmem:[%s3 + $0x98] sm:$0xff] %vm57, %v316
  %399 = vst.msk [vmem:[%s3 + $0xa0] sm:$0xff] %vm57, %v321
  %400 = vst.msk [vmem:[%s3 + $0xa8] sm:$0xff] %vm57, %v326
  %401 = vst.msk [vmem:[%s3 + $0xb0] sm:$0xff] %vm57, %v331
  %402 = vst.msk [vmem:[%s3 + $0xb8] sm:$0xff] %vm57, %v336
  %403 = vst.msk [vmem:[%s3 + $0xc0] sm:$0xff] %vm57, %v341
  %404 = vst.msk [vmem:[%s3 + $0xc8] sm:$0xff] %vm57, %v346
  %405 = vst.msk [vmem:[%s3 + $0xd0] sm:$0xff] %vm57, %v351
  %406 = vst.msk [vmem:[%s3 + $0xd8] sm:$0xff] %vm57, %v356
  %407 = vst.msk [vmem:[%s3 + $0xe0] sm:$0xff] %vm57, %v361
  %408 = vst.msk [vmem:[%s3 + $0xe8] sm:$0xff] %vm57, %v366
  %409 = vst.msk [vmem:[%s3 + $0xf0] sm:$0xff] %vm57, %v371
  %410 = vst.msk [vmem:[%s3 + $0xf8] sm:$0xff] %vm57, %v376
  %443 = vrot.lane.b32.xlu0 %v221, 112
  %v444 = vpop.permute.xlu0 %443
  %445 = vrot.lane.b32.xlu0 %v226, 112
  %v446 = vpop.permute.xlu0 %445
  %447 = vrot.lane.b32.xlu0 %v231, 112
  %v448 = vpop.permute.xlu0 %447
  %449 = vrot.lane.b32.xlu0 %v236, 112
  %v450 = vpop.permute.xlu0 %449
  %451 = vrot.lane.b32.xlu0 %v241, 112
  %v452 = vpop.permute.xlu0 %451
  %453 = vrot.lane.b32.xlu0 %v246, 112
  %v454 = vpop.permute.xlu0 %453
  %455 = vrot.lane.b32.xlu0 %v251, 112
  %v456 = vpop.permute.xlu0 %455
  %457 = vrot.lane.b32.xlu0 %v256, 112
  %v458 = vpop.permute.xlu0 %457
  %459 = vrot.lane.b32.xlu0 %v261, 112
  %v460 = vpop.permute.xlu0 %459
  %461 = vrot.lane.b32.xlu0 %v266, 112
  %v462 = vpop.permute.xlu0 %461
  %463 = vrot.lane.b32.xlu0 %v271, 112
  %v464 = vpop.permute.xlu0 %463
  %465 = vrot.lane.b32.xlu0 %v276, 112
  %v466 = vpop.permute.xlu0 %465
  %467 = vrot.lane.b32.xlu0 %v281, 112
  %v468 = vpop.permute.xlu0 %467
  %469 = vrot.lane.b32.xlu0 %v286, 112
  %v470 = vpop.permute.xlu0 %469
  %471 = vrot.lane.b32.xlu0 %v291, 112
  %v472 = vpop.permute.xlu0 %471
  %473 = vrot.lane.b32.xlu0 %v296, 112
  %v474 = vpop.permute.xlu0 %473
  %475 = vrot.lane.b32.xlu0 %v301, 112
  %v476 = vpop.permute.xlu0 %475
  %477 = vrot.lane.b32.xlu0 %v306, 112
  %v478 = vpop.permute.xlu0 %477
  %479 = vrot.lane.b32.xlu0 %v311, 112
  %v480 = vpop.permute.xlu0 %479
  %481 = vrot.lane.b32.xlu0 %v316, 112
  %v482 = vpop.permute.xlu0 %481
  %483 = vrot.lane.b32.xlu0 %v321, 112
  %v484 = vpop.permute.xlu0 %483
  %485 = vrot.lane.b32.xlu0 %v326, 112
  %v486 = vpop.permute.xlu0 %485
  %487 = vrot.lane.b32.xlu0 %v331, 112
  %v488 = vpop.permute.xlu0 %487
  %489 = vrot.lane.b32.xlu0 %v336, 112
  %v490 = vpop.permute.xlu0 %489
  %491 = vrot.lane.b32.xlu0 %v341, 112
  %v492 = vpop.permute.xlu0 %491
  %493 = vrot.lane.b32.xlu0 %v346, 112
  %v494 = vpop.permute.xlu0 %493
  %495 = vrot.lane.b32.xlu0 %v351, 112
  %v496 = vpop.permute.xlu0 %495
  %497 = vrot.lane.b32.xlu0 %v356, 112
  %v498 = vpop.permute.xlu0 %497
  %499 = vrot.lane.b32.xlu0 %v361, 112
  %v500 = vpop.permute.xlu0 %499
  %501 = vrot.lane.b32.xlu0 %v366, 112
  %v502 = vpop.permute.xlu0 %501
  %503 = vrot.lane.b32.xlu0 %v371, 112
  %v504 = vpop.permute.xlu0 %503
  %505 = vrot.lane.b32.xlu0 %v376, 112
  %v506 = vpop.permute.xlu0 %505
  %vm539 = vcmask 392192
  %540 = vst.msk [vmem:[%s4] sm:$0xff] %vm539, %v444
  %541 = vst.msk [vmem:[%s4 + $0x8] sm:$0xff] %vm539, %v446
  %542 = vst.msk [vmem:[%s4 + $0x10] sm:$0xff] %vm539, %v448
  %543 = vst.msk [vmem:[%s4 + $0x18] sm:$0xff] %vm539, %v450
  %544 = vst.msk [vmem:[%s4 + $0x20] sm:$0xff] %vm539, %v452
  %545 = vst.msk [vmem:[%s4 + $0x28] sm:$0xff] %vm539, %v454
  %546 = vst.msk [vmem:[%s4 + $0x30] sm:$0xff] %vm539, %v456
  %547 = vst.msk [vmem:[%s4 + $0x38] sm:$0xff] %vm539, %v458
  %548 = vst.msk [vmem:[%s4 + $0x40] sm:$0xff] %vm539, %v460
  %549 = vst.msk [vmem:[%s4 + $0x48] sm:$0xff] %vm539, %v462
  %550 = vst.msk [vmem:[%s4 + $0x50] sm:$0xff] %vm539, %v464
  %551 = vst.msk [vmem:[%s4 + $0x58] sm:$0xff] %vm539, %v466
  %552 = vst.msk [vmem:[%s4 + $0x60] sm:$0xff] %vm539, %v468
  %553 = vst.msk [vmem:[%s4 + $0x68] sm:$0xff] %vm539, %v470
  %554 = vst.msk [vmem:[%s4 + $0x70] sm:$0xff] %vm539, %v472
  %555 = vst.msk [vmem:[%s4 + $0x78] sm:$0xff] %vm539, %v474
  %556 = vst.msk [vmem:[%s4 + $0x80] sm:$0xff] %vm539, %v476
  %557 = vst.msk [vmem:[%s4 + $0x88] sm:$0xff] %vm539, %v478
  %558 = vst.msk [vmem:[%s4 + $0x90] sm:$0xff] %vm539, %v480
  %559 = vst.msk [vmem:[%s4 + $0x98] sm:$0xff] %vm539, %v482
  %560 = vst.msk [vmem:[%s4 + $0xa0] sm:$0xff] %vm539, %v484
  %561 = vst.msk [vmem:[%s4 + $0xa8] sm:$0xff] %vm539, %v486
  %562 = vst.msk [vmem:[%s4 + $0xb0] sm:$0xff] %vm539, %v488
  %563 = vst.msk [vmem:[%s4 + $0xb8] sm:$0xff] %vm539, %v490
  %564 = vst.msk [vmem:[%s4 + $0xc0] sm:$0xff] %vm539, %v492
  %565 = vst.msk [vmem:[%s4 + $0xc8] sm:$0xff] %vm539, %v494
  %566 = vst.msk [vmem:[%s4 + $0xd0] sm:$0xff] %vm539, %v496
  %567 = vst.msk [vmem:[%s4 + $0xd8] sm:$0xff] %vm539, %v498
  %568 = vst.msk [vmem:[%s4 + $0xe0] sm:$0xff] %vm539, %v500
  %569 = vst.msk [vmem:[%s4 + $0xe8] sm:$0xff] %vm539, %v502
  %570 = vst.msk [vmem:[%s4 + $0xf0] sm:$0xff] %vm539, %v504
  %571 = vst.msk [vmem:[%s4 + $0xf8] sm:$0xff] %vm539, %v506
  // Predicated region
  $region14: #{tpu_custom_call.1} parent=0 // pred_check
    _
  $region15: #{tpu_custom_call.1} parent=0 // pred_check_branch
    %573 = sbr.rel (0) target = $region17
  $region16: #{tpu_custom_call.1} parent=0 // pred_region
    _
  $region17: #{tpu_custom_call.1} parent=0 // pred_fallthru
    _
  // Predicated region
  $region18: #{tpu_custom_call.1} parent=0 // pred_check
    _
  $region19: #{tpu_custom_call.1} parent=0 // pred_check_branch
    %575 = sbr.rel (0) target = $region21
  $region20: #{tpu_custom_call.1} parent=0 // pred_region
    _
  $region21: #{tpu_custom_call.1} parent=0 // pred_fallthru
    _
  // Predicated region
  $region22: #{tpu_custom_call.1} parent=0 // pred_check
    _
  $region23: #{tpu_custom_call.1} parent=0 // pred_check_branch
    %577 = sbr.rel (0) target = $region25
  $region24: #{tpu_custom_call.1} parent=0 // pred_region
    _
  $region25: #{tpu_custom_call.1} parent=0 // pred_fallthru
    _
  // Predicated region
  $region26: #{tpu_custom_call.1} parent=0 // pred_check
    _
  $region27: #{tpu_custom_call.1} parent=0 // pred_check_branch
    %579 = sbr.rel (0) target = $region29
  $region28: #{tpu_custom_call.1} parent=0 // pred_region
    _
  $region29: #{tpu_custom_call.1} parent=0 // pred_fallthru
    _

</llo_original>
